<compile_context>
chip_gen: v7x
topology: tpu7x:2x2x1
jax: 0.10.0
libtpu: 0.0.40
codegen_flags: <defaults>
</compile_context>

<pallas_src>
import functools

import jax
import jax.numpy as jnp
import numpy as np
from jax.experimental import pallas as pl
from jax.experimental.pallas import tpu as pltpu

# ---- OGB-style atom feature vocab sizes (synthetic, deterministic) ----
ATOM_FEATURE_DIMS = (119, 4, 12, 12, 10, 6, 6, 2, 2)
NUM_FEATS = len(ATOM_FEATURE_DIMS)                      # 9
V_TOTAL = sum(ATOM_FEATURE_DIMS)                        # 173 fused atom rows
FEATURE_OFFSETS = np.cumsum((0,) + ATOM_FEATURE_DIMS[:-1]).astype(np.int32)
NUM_IDX_COLS = 16                                       # K dim of selector matmul

_HI = jax.lax.Precision.HIGHEST


def _round_up(x, m):
    return ((x + m - 1) // m) * m


def _sparse_atom_encoder_kernel(idx_ref, sel_ref, tab_ref, out_ref):
    """One grid step handles `tile_n` nodes; both heavy ops run on the MXU.

    idx_ref : [tile_n, 16] f32  per-node global indices (9 atom cols, 1 rxn
              col, 5 zero cols, last col == 1.0); small exact integers.
    sel_ref : [16, V_pad]  f32  static selector; row f = 0/1 indicator of
              feature f's offset range, row 15 = -lane_index.
    tab_ref : [V_pad, dim] f32  Linear-folded fused table (zero pad rows).
    out_ref : [tile_n, dim] f32
    """
    # comparand[n, v] = idx[n, owner(v)] - v.  Exact: operands are small
    # integers, only two non-zero products per lane, f32 accumulation.
    comparand = jnp.dot(idx_ref[...], sel_ref[...],
                        preferred_element_type=jnp.float32)        # MXU #1
    # Multi-hot row selector (exact 0/1); index ranges are disjoint.
    onehot = (comparand == 0.0).astype(jnp.float32)                # 1 cmp + 1 cast
    # Gathers + feature sum + concat + Linear + bias, fused in one matmul.
    out_ref[...] = jnp.dot(onehot, tab_ref[...],
                           preferred_element_type=jnp.float32,
                           precision=_HI)                          # MXU #2


def prepare_sparse_atom_encoder_params(atom_table, rxn_table, lin_w, lin_b):
    """Fold the Linear into the tables + build the static selector matrix.

    Call once per weight set (load time) and reuse across forward calls.
    """
    dim = atom_table.shape[1]
    n_class = rxn_table.shape[0]
    V = V_TOTAL + n_class
    V_pad = _round_up(V, 128)

    # Linear acts on concat([rxn_emb, atom_emb]):
    #   out = rxn_emb @ W[:, :dim].T + atom_emb @ W[:, dim:].T + b
    atab_fused = jnp.dot(atom_table, lin_w[:, dim:].T, precision=_HI)
    rtab_fused = jnp.dot(rxn_table, lin_w[:, :dim].T, precision=_HI) + lin_b[None, :]
    fused = jnp.concatenate([atab_fused, rtab_fused], axis=0)      # [V, dim]
    fused = jnp.pad(fused, ((0, V_pad - V), (0, 0)))               # zero pad rows

    # Static selector (compile-time numpy constant).
    sel = np.zeros((NUM_IDX_COLS, V_pad), np.float32)
    for f in range(NUM_FEATS):
        lo = int(FEATURE_OFFSETS[f])
        sel[f, lo:lo + ATOM_FEATURE_DIMS[f]] = 1.0
    sel[NUM_FEATS, V_TOTAL:V] = 1.0                                 # rxn range
    sel[NUM_IDX_COLS - 1, :] = -np.arange(V_pad, dtype=np.float32)  # folded iota
    return fused, jnp.asarray(sel)


@functools.partial(jax.jit, static_argnames=("tile_n",))
def sparse_atom_encoder(node_feat, rxn_class, fused_table, selector, *,
                        tile_n=1024):
    """node_feat: [N, NUM_FEATS] int32, rxn_class: [N] int32 -> [N, dim] f32."""
    N = node_feat.shape[0]
    V_pad, dim = fused_table.shape

    # --- adaptive tile: clamp for small graphs; keep >= 2 grid steps so the
    # node axis can shard across both v7x TensorCores under "parallel". ---
    t = max(8, min(tile_n, _round_up(N, 8)))
    t = _round_up(t, 8)
    if _round_up(N, t) // t < 2 and t > 8:
        t = _round_up((t + 1) // 2, 8)
    N_pad = _round_up(N, t)

    # --- per-node global indices into the fused table, padded to 16 columns;
    # the last column is 1.0 (it multiplies selector row 15 == -lane_index so
    # the iota comparison is folded into the selector matmul). ---
    node_idx = node_feat.astype(jnp.int32) + jnp.asarray(FEATURE_OFFSETS)[None, :]
    rxn_idx = rxn_class.astype(jnp.int32).reshape(N, 1) + V_TOTAL
    pad_cols = jnp.zeros((N, NUM_IDX_COLS - (NUM_FEATS + 1) - 1), jnp.float32)
    ones_col = jnp.ones((N, 1), jnp.float32)
    idx = jnp.concatenate(
        [node_idx.astype(jnp.float32), rxn_idx.astype(jnp.float32),
         pad_cols, ones_col], axis=1)                               # [N, 16]
    idx = jnp.pad(idx, ((0, N_pad - N), (0, 0)))                    # pad rows -> sliced off

    grid = (N_pad // t,)
    out = pl.pallas_call(
        _sparse_atom_encoder_kernel,
        out_shape=jax.ShapeDtypeStruct((N_pad, dim), jnp.float32),
        grid_spec=pltpu.PrefetchScalarGridSpec(
            num_scalar_prefetch=0,
            grid=grid,
            in_specs=[
                pl.BlockSpec((t, NUM_IDX_COLS), lambda i: (i, 0)),
                pl.BlockSpec((NUM_IDX_COLS, V_pad), lambda i: (0, 0)),
                pl.BlockSpec((V_pad, dim), lambda i: (0, 0)),
            ],
            out_specs=pl.BlockSpec((t, dim), lambda i: (i, 0)),
        ),
        compiler_params=pltpu.CompilerParams(
            dimension_semantics=("parallel",)),
    )(idx, selector, fused_table)

    return out[:N]


def reference(node_feat, rxn_class, atom_table, rxn_table, lin_w, lin_b):
    """Pure-JAX reference matching the PyTorch forward."""
    idx = node_feat + jnp.asarray(FEATURE_OFFSETS)[None, :]
    atom_emb = jnp.sum(atom_table[idx], axis=1)                     # [N, dim]
    rxn_emb = rxn_table[rxn_class]                                  # [N, dim]
    cat = jnp.concatenate([rxn_emb, atom_emb], axis=-1)             # [N, 2*dim]
    return jnp.dot(cat, lin_w.T, precision=_HI) + lin_b


if __name__ == "__main__":
    dim = 32
    n_class = 10
    N = 16        # number of nodes (graph atoms)

    key = jax.random.PRNGKey(0)
    k_feat, k_rxn, k_atab, k_rtab, k_w, k_b = jax.random.split(key, 6)

    # Deterministic synthetic inputs / parameters.
    node_feat = jnp.stack(
        [jax.random.randint(jax.random.fold_in(k_feat, f), (N,), 0, v)
         for f, v in enumerate(ATOM_FEATURE_DIMS)], axis=1).astype(jnp.int32)
    rxn_class = jax.random.randint(k_rxn, (N,), 0, n_class).astype(jnp.int32)

    atom_table = jax.random.normal(k_atab, (V_TOTAL, dim), jnp.float32) * 0.1
    rxn_table = jax.random.normal(k_rtab, (n_class, dim), jnp.float32) * 0.1
    lin_w = jax.random.normal(k_w, (dim, 2 * dim), jnp.float32) * 0.05
    lin_b = jax.random.normal(k_b, (dim,), jnp.float32) * 0.05

    # Fold the Linear into the tables ONCE, outside the jitted forward.
    fused_table, selector = prepare_sparse_atom_encoder_params(
        atom_table, rxn_table, lin_w, lin_b)
    fused_table = jax.block_until_ready(fused_table)

    out = sparse_atom_encoder(node_feat, rxn_class, fused_table, selector)
    out = jax.block_until_ready(out)

    ref = reference(node_feat, rxn_class, atom_table, rxn_table, lin_w, lin_b)
    np.testing.assert_allclose(np.asarray(out), np.asarray(ref),
                               rtol=1e-5, atol=1e-5)
    print("KERNEL_OK")
</pallas_src>

<mosaic_0001>
module attributes {stable_mosaic.version = 11 : i64} {
  func.func @_sparse_atom_encoder_kernel(%arg0: i32, %arg1: memref<8x16xf32, #tpu.memory_space<vmem>>, %arg2: memref<16x256xf32, #tpu.memory_space<vmem>>, %arg3: memref<256x32xf32, #tpu.memory_space<vmem>>, %arg4: memref<8x32xf32, #tpu.memory_space<vmem>>) attributes {dimension_semantics = [#tpu.dimension_semantics<parallel>], iteration_bounds = array<i64: 2>, scalar_prefetch = 0 : i64, scratch_operands = 0 : i64, tpu.core_type = #tpu.core_type<tc>, window_params = [{transform_indices = @transform_0, window_bounds = array<i64: 8, 16>}, {pipeline_mode = #tpu.pipeline_mode<synchronous>, transform_indices = @transform_1, window_bounds = array<i64: 16, 256>}, {pipeline_mode = #tpu.pipeline_mode<synchronous>, transform_indices = @transform_2, window_bounds = array<i64: 256, 32>}, {transform_indices = @transform_3, window_bounds = array<i64: 8, 32>}]} {
    %c0 = arith.constant 0 : index
    %c0_0 = arith.constant 0 : index
    %0 = vector.load %arg1[%c0, %c0_0] : memref<8x16xf32, #tpu.memory_space<vmem>>, vector<8x16xf32>
    %c0_1 = arith.constant 0 : index
    %c0_2 = arith.constant 0 : index
    %1 = vector.load %arg2[%c0_1, %c0_2] : memref<16x256xf32, #tpu.memory_space<vmem>>, vector<16x256xf32>
    %cst = arith.constant dense<0.000000e+00> : vector<8x256xf32>
    %2 = tpu.matmul %0, %1, %cst {dimension_numbers = #tpu.dot_dimension_numbers<[1], [0], [0], [1], [0, 0, 1, 1], [], []>} : vector<8x16xf32>, vector<16x256xf32>, vector<8x256xf32> -> vector<8x256xf32>
    %cst_3 = arith.constant 0.000000e+00 : f32
    %3 = vector.broadcast %cst_3 : f32 to vector<8x256xf32>
    %4 = arith.cmpf oeq, %2, %3 : vector<8x256xf32>
    %5 = arith.extui %4 : vector<8x256xi1> to vector<8x256xi32>
    %6 = arith.sitofp %5 : vector<8x256xi32> to vector<8x256xf32>
    %c0_4 = arith.constant 0 : index
    %c0_5 = arith.constant 0 : index
    %7 = vector.load %arg3[%c0_4, %c0_5] : memref<256x32xf32, #tpu.memory_space<vmem>>, vector<256x32xf32>
    %cst_6 = arith.constant dense<0.000000e+00> : vector<8x32xf32>
    %8 = tpu.matmul %6, %7, %cst_6 {dimension_numbers = #tpu.dot_dimension_numbers<[1], [0], [0], [1], [0, 0, 1, 1], [], []>, precision = #tpu.contract_precision<fp32>} : vector<8x256xf32>, vector<256x32xf32>, vector<8x32xf32> -> vector<8x32xf32>
    %c0_7 = arith.constant 0 : index
    %c0_8 = arith.constant 0 : index
    %9 = vector.load %arg4[%c0_7, %c0_8] : memref<8x32xf32, #tpu.memory_space<vmem>>, vector<8x32xf32>
    tpu.vector_store %arg4[%c0_7, %c0_8], %8 {strides = array<i32>} : memref<8x32xf32, #tpu.memory_space<vmem>>, vector<8x32xf32>,
    return
  }
  func.func @transform_0(%arg0: i32) -> (i32, i32) {
    %c0_i32 = arith.constant 0 : i32
    %c0_i32_0 = arith.constant 0 : i32
    return %arg0, %c0_i32 : i32, i32
  }
  func.func @transform_1(%arg0: i32) -> (i32, i32) {
    %c0_i32 = arith.constant 0 : i32
    %c0_i32_0 = arith.constant 0 : i32
    %c0_i32_1 = arith.constant 0 : i32
    return %c0_i32, %c0_i32_0 : i32, i32
  }
  func.func @transform_2(%arg0: i32) -> (i32, i32) {
    %c0_i32 = arith.constant 0 : i32
    %c0_i32_0 = arith.constant 0 : i32
    %c0_i32_1 = arith.constant 0 : i32
    return %c0_i32, %c0_i32_0 : i32, i32
  }
  func.func @transform_3(%arg0: i32) -> (i32, i32) {
    %c0_i32 = arith.constant 0 : i32
    %c0_i32_0 = arith.constant 0 : i32
    return %arg0, %c0_i32 : i32, i32
  }
}

</mosaic_0001>

<llo_original>
// kernel: sparse_atom_encoder.1
$region0: #{sparse_atom_encoder.1}
  #allocation0 [shape = 'u32[]', space=smem, size = 0x4, offset = 0x4, fixed_abs, tag = 'smem constant byte address 0x4 - core index']
  #allocation1 [shape = 'u32[144,128]{1,0:T(1,128)}', space=vmem, size = 0x12000, scoped, tag = 'internal scratch']
  %s0 = inlined_call_operand.vmem [shape: f32[16,16], index: 0, kind: input, shape index: {}]
  %s1 = inlined_call_operand.vmem [shape: f32[16,256], index: 1, kind: input, shape index: {}]
  %s2 = inlined_call_operand.vmem [shape: f32[256,32], index: 2, kind: input, shape index: {}]
  %s3 = inlined_call_operand.hbm [shape: f32[16,32], index: 3, kind: output, shape index: {}]
  %s4 = sld [smem:[#allocation0]]
  $region45: #{sparse_atom_encoder.1} parent=0
    _
  %s6 = ssub.s32 1, %s4
  %s7 = scalar_select 0, %s6, %s4
  $region1: #{sparse_atom_encoder.1} parent=0
    #allocation2 [shape = 'u8[8192]{0}', space=vmem, size = 0x2000, scoped, tag = 'output window, operand 0']
    #allocation3 [shape = 's32[2]{0}', space=sflag, size = 0x8, scoped, tag = 'scoped memory for sparse_atom_encoder.1']
    %8 = vsyncpa [#allocation3], 0
    %s9 = scalar_lea.sflag [#allocation3], 1
    %10 = vsyncpa %s9, 0
    loop: start=0, step=1, limit=4
    $region2: #{sparse_atom_encoder.1} parent=1 // loop_pre_header
      _
    $region3: #{sparse_atom_encoder.1} parent=1 // loop_header
      %s12 = sphi 0, %s16
      %p13 = scmp.ge.s32.totalorder %s12, 4
      %s22 = sphi 0, %s24
      %s25 = sphi 0, %s22
      %s26 = sphi 0, %s25
      %s42 = sphi 0, %s26
      %s46 = sphi 0, %s46
      %s48 = sphi 0, %s46
      %s49 = sphi 0, %s48
      %s63 = sphi 0, %s49
      %s67 = sphi 0, %s67
      %s69 = sphi 0, %s67
      %s70 = sphi 0, %s69
      %s84 = sphi 0, %s70
      %s90 = sphi 0, %s92
      %s93 = sphi 0, %s90
      %s94 = sphi 0, %s93
      %s110 = sphi 0, %s94
    $region4: #{sparse_atom_encoder.1} parent=1 // loop_header_branch
      %15 = sbr.rel (%p13) target = $region8
    $region5: #{sparse_atom_encoder.1} parent=1 // loop_body
      %s17 = ssub.s32 %s12, 1
      %s18 = ssub.s32 %s12, 2
      %s19 = sadd.s32 %s12, 1
      %s20 = ssub.s32 %s12, %s19
      %p21 = scmp.eq.s32.totalorder %s20, 0
      %s23 = sadd.s32 %s22, 1
      %s24 = scalar_select %p21, %s22, %s23
      %p27 = pneg %p21
      %p28 = scmp.eq.s32.totalorder %s12, 1
      %p29 = por %p27, %p28
      %p30 = scmp.ne.s32.totalorder %s22, %s25
      %p31 = scmp.eq.s32.totalorder %s12, 0
      %p32 = por %p30, %p31
      %p33 = scmp.ne.s32.totalorder %s22, %s25
      %p34 = scmp.eq.s32.totalorder %s17, 1
      %p35 = por %p33, %p34
      %p36 = scmp.ne.s32.totalorder %s25, %s26
      %p37 = scmp.eq.s32.totalorder %s17, 0
      %p38 = por %p36, %p37
      %p39 = scmp.ne.s32.totalorder %s25, %s26
      %p40 = scmp.eq.s32.totalorder %s18, 1
      %p41 = por %p39, %p40
      %p43 = scmp.ne.s32.totalorder %s26, %s42
      %p44 = scmp.eq.s32.totalorder %s18, 0
      %p45 = por %p43, %p44
      %s47 = sadd.s32 %s46, 1
      %p50 = scmp.eq.s32.totalorder %s12, 1
      %p51 = scmp.ne.s32.totalorder %s46, %s48
      %p52 = scmp.eq.s32.totalorder %s12, 0
      %p53 = por %p51, %p52
      %p54 = scmp.ne.s32.totalorder %s46, %s48
      %p55 = scmp.eq.s32.totalorder %s17, 1
      %p56 = por %p54, %p55
      %p57 = scmp.ne.s32.totalorder %s48, %s49
      %p58 = scmp.eq.s32.totalorder %s17, 0
      %p59 = por %p57, %p58
      %p60 = scmp.ne.s32.totalorder %s48, %s49
      %p61 = scmp.eq.s32.totalorder %s18, 1
      %p62 = por %p60, %p61
      %p64 = scmp.ne.s32.totalorder %s49, %s63
      %p65 = scmp.eq.s32.totalorder %s18, 0
      %p66 = por %p64, %p65
      %s68 = sadd.s32 %s67, 1
      %p71 = scmp.eq.s32.totalorder %s12, 1
      %p72 = scmp.ne.s32.totalorder %s67, %s69
      %p73 = scmp.eq.s32.totalorder %s12, 0
      %p74 = por %p72, %p73
      %p75 = scmp.ne.s32.totalorder %s67, %s69
      %p76 = scmp.eq.s32.totalorder %s17, 1
      %p77 = por %p75, %p76
      %p78 = scmp.ne.s32.totalorder %s69, %s70
      %p79 = scmp.eq.s32.totalorder %s17, 0
      %p80 = por %p78, %p79
      %p81 = scmp.ne.s32.totalorder %s69, %s70
      %p82 = scmp.eq.s32.totalorder %s18, 1
      %p83 = por %p81, %p82
      %p85 = scmp.ne.s32.totalorder %s70, %s84
      %p86 = scmp.eq.s32.totalorder %s18, 0
      %p87 = por %p85, %p86
      %s88 = ssub.s32 %s12, %s19
      %p89 = scmp.eq.s32.totalorder %s88, 0
      %s91 = sadd.s32 %s90, 1
      %s92 = scalar_select %p89, %s90, %s91
      %p95 = pneg %p89
      %p96 = scmp.eq.s32.totalorder %s12, 1
      %p97 = por %p95, %p96
      %p98 = scmp.ne.s32.totalorder %s90, %s93
      %p99 = scmp.eq.s32.totalorder %s12, 0
      %p100 = por %p98, %p99
      %p101 = scmp.ne.s32.totalorder %s90, %s93
      %p102 = scmp.eq.s32.totalorder %s17, 1
      %p103 = por %p101, %p102
      %p104 = scmp.ne.s32.totalorder %s93, %s94
      %p105 = scmp.eq.s32.totalorder %s17, 0
      %p106 = por %p104, %p105
      %p107 = scmp.ne.s32.totalorder %s93, %s94
      %p108 = scmp.eq.s32.totalorder %s18, 1
      %p109 = por %p107, %p108
      %p111 = scmp.ne.s32.totalorder %s94, %s110
      %p112 = scmp.eq.s32.totalorder %s18, 0
      %p113 = por %p111, %p112
      %p114 = scmp.le.s32.totalorder 1, %s12
      %p115 = scmp.lt.s32.totalorder %s12, 3
      %p116 = pnand %p114, %p115
      %p117 = pneg %p116
      // Predicated region
      $region9: #{sparse_atom_encoder.1} parent=5 // pred_check
        _
      $region10: #{sparse_atom_encoder.1} parent=5 // pred_check_branch
        %119 = sbr.rel (%p116) target = $region12
      $region11: #{sparse_atom_encoder.1} parent=5 // pred_region
        %s120 = ssub.s32 %s12, 1
        // Predicated region
        $region13: #{sparse_atom_encoder.1} parent=11 // pred_check
          %p121 = pneg %p59
        $region14: #{sparse_atom_encoder.1} parent=11 // pred_check_branch
          %123 = sbr.rel (%p121) target = $region16
        $region15: #{sparse_atom_encoder.1} parent=11 // pred_region
          _
        $region16: #{sparse_atom_encoder.1} parent=11 // pred_fallthru
          _
        // Predicated region
        $region17: #{sparse_atom_encoder.1} parent=11 // pred_check
          %p124 = pneg %p80
        $region18: #{sparse_atom_encoder.1} parent=11 // pred_check_branch
          %126 = sbr.rel (%p124) target = $region20
        $region19: #{sparse_atom_encoder.1} parent=11 // pred_region
          _
        $region20: #{sparse_atom_encoder.1} parent=11 // pred_fallthru
          _
      $region12: #{sparse_atom_encoder.1} parent=5 // pred_fallthru
        _
      %p127 = scmp.lt.s32.totalorder %s12, 2
      // Predicated region
      $region21: #{sparse_atom_encoder.1} parent=5 // pred_check
        %p128 = pneg %p127
      $region22: #{sparse_atom_encoder.1} parent=5 // pred_check_branch
        %130 = sbr.rel (%p128) target = $region24
      $region23: #{sparse_atom_encoder.1} parent=5 // pred_region
        // Predicated region
        $region25: #{sparse_atom_encoder.1} parent=23 // pred_check
          %p131 = pneg %p32
        $region26: #{sparse_atom_encoder.1} parent=23 // pred_check_branch
          %133 = sbr.rel (%p131) target = $region28
        $region27: #{sparse_atom_encoder.1} parent=23 // pred_region
          %p134 = scmp.lt.s32.totalorder %s12, 1
          %s135 = scalar_select %p134, %s12, 1
          %s136 = smul.addr %s135, 8
          %s137 = scalar_lea.vmem %s0, %s136
        $region28: #{sparse_atom_encoder.1} parent=23 // pred_fallthru
          _
      $region24: #{sparse_atom_encoder.1} parent=5 // pred_fallthru
        _
      %p138 = scmp.le.s32.totalorder 1, %s12
      %p139 = scmp.lt.s32.totalorder %s12, 3
      %p140 = pnand %p138, %p139
      %p141 = pneg %p140
      // Predicated region
      $region29: #{sparse_atom_encoder.1} parent=5 // pred_check
        _
      $region30: #{sparse_atom_encoder.1} parent=5 // pred_check_branch
        %143 = sbr.rel (%p140) target = $region32
      $region31: #{sparse_atom_encoder.1} parent=5 // pred_region
        %s144 = ssub.s32 %s12, 1
        %p145 = scmp.lt.s32.totalorder %s17, 1
        %s146 = scalar_select %p145, %s17, 1
        %s147 = smul.addr %s146, 8
        %s148 = scalar_lea.vmem %s0, %s147
        %p149 = pneg %p38
        %p150 = pneg %p35
        %p151 = pneg %p59
        %p152 = pneg %p56
        %p153 = pneg %p80
        %p154 = pneg %p77
        %p155 = pneg %p106
        %p156 = pneg %p103
        %s157 = sand.u32 %s93, 1
        %s158 = scalar_lea.sflag [#allocation3], %s157
        %s159 = sand.u32 %s93, 1
        %s160 = smul.addr %s159, 8
        %s161 = scalar_lea.vmem [#allocation2], %s160
        %p162 = scmp.lt.s32.totalorder %s17, 1
        %s163 = scalar_select %p162, %s17, 1
        %s164 = smul.addr %s163, 8
        %s165 = scalar_lea.vmem %s0, %s164
        %v166 = vld [vmem:[%s165] sm:$0xff]
        %v167 = vld [vmem:[%s1] sm:$0xff]
        %v168 = vld [vmem:[%s1 + $0x8] sm:$0xff]
        %v169 = vld [vmem:[%s1 + $0x10] sm:$0xff]
        %v170 = vld [vmem:[%s1 + $0x18] sm:$0xff]
        %vm171 = vcmask 130048
        %v173 = vsel %vm171, %v166, 0
        %175 = vmatprep.subr.mxu0 %v168
        %176 = vmatpush1.msra.mxu0 %v167
        %177 = vmatprep.subr.mxu0 %v170
        %178 = vmatpush1.msra.mxu0 %v169
        %179 = vmatprep.subr.mxu0 0.0
        %180 = vmatpush1.msra.mxu0 0.0
        %181 = vmatprep.subr.mxu0 0.0
        %182 = vmatpush1.msra.mxu0 0.0
        %183 = vmatprep.subr.mxu0 0.0
        %184 = vmatpush1.msra.mxu0 0.0
        %185 = vmatprep.subr.mxu0 0.0
        %186 = vmatpush1.msra.mxu0 0.0
        %187 = vmatprep.subr.mxu0 0.0
        %188 = vmatpush1.msra.mxu0 0.0
        %189 = vmatprep.subr.mxu0 0.0
        %190 = vmatpush1.msra.mxu0 0.0
        %191 = vmatprep.subr.mxu0 0.0
        %192 = vmatpush1.msra.mxu0 0.0
        %193 = vmatprep.subr.mxu0 0.0
        %194 = vmatpush1.msra.mxu0 0.0
        %195 = vmatprep.subr.mxu0 0.0
        %196 = vmatpush1.msra.mxu0 0.0
        %197 = vmatprep.subr.mxu0 0.0
        %198 = vmatpush1.msra.mxu0 0.0
        %199 = vmatprep.subr.mxu0 0.0
        %200 = vmatpush1.msra.mxu0 0.0
        %201 = vmatprep.subr.mxu0 0.0
        %202 = vmatpush1.msra.mxu0 0.0
        %203 = vmatprep.subr.mxu0 0.0
        %204 = vmatpush1.msra.mxu0 0.0
        %205 = vmatprep.subr.mxu0 0.0
        %206 = vmatpush1.msra.mxu0 0.0
        %207 = vmatprep.subr.mxu0 0.0
        %208 = vmatpush1.msra.mxu0 0.0
        %209 = vmatprep.subr.mxu0 0.0
        %210 = vmatpush1.msra.mxu0 0.0
        %211 = vmatprep.subr.mxu0 0.0
        %212 = vmatpush1.msra.mxu0 0.0
        %213 = vmatprep.subr.mxu0 0.0
        %214 = vmatpush1.msra.mxu0 0.0
        %215 = vmatprep.subr.mxu0 0.0
        %216 = vmatpush1.msra.mxu0 0.0
        %217 = vmatprep.subr.mxu0 0.0
        %218 = vmatpush1.msra.mxu0 0.0
        %219 = vmatprep.subr.mxu0 0.0
        %220 = vmatpush1.msra.mxu0 0.0
        %221 = vmatprep.subr.mxu0 0.0
        %222 = vmatpush1.msra.mxu0 0.0
        %223 = vmatprep.subr.mxu0 0.0
        %224 = vmatpush1.msra.mxu0 0.0
        %225 = vmatprep.subr.mxu0 0.0
        %226 = vmatpush1.msra.mxu0 0.0
        %227 = vmatprep.subr.mxu0 0.0
        %228 = vmatpush1.msra.mxu0 0.0
        %229 = vmatprep.subr.mxu0 0.0
        %230 = vmatpush1.msra.mxu0 0.0
        %231 = vmatprep.subr.mxu0 0.0
        %232 = vmatpush1.msra.mxu0 0.0
        %233 = vmatprep.subr.mxu0 0.0
        %234 = vmatpush1.msra.mxu0 0.0
        %235 = vmatprep.subr.mxu0 0.0
        %236 = vmatpush1.msra.mxu0 0.0
        %237 = vmatprep.subr.mxu0 0.0
        %238 = vmatpush1.msra.mxu0 0.0
        %239 = vmatprep.mubr.f32.mxu0 0.0
        %240 = vmatmul.mubr.f32.gmra.mrb[0].mxu0 %v173
        %v241 = vpop.f32.mrb[0].mxu0
        %v242 = vadd.f32 0.0, %v241
        %v243 = vpop.f32.mrb[0].mxu0
        %v244 = vadd.f32 0.0, %v243
        %245 = vdwg.mxu0
        %vm246 = vcmp.eq.f32.partialorder %v242, 0.0
        %vm247 = vcmp.eq.f32.partialorder %v244, 0.0
        %v248 = vsel %vm246, 1, 0
        %v249 = vsel %vm247, 1, 0
        %v250 = vcvt.s32.f32 %v248
        %v251 = vcvt.s32.f32 %v249
        %v252 = vld [vmem:[%s2] sm:$0xff]
        %v253 = vld [vmem:[%s2 + $0x8] sm:$0xff]
        %v254 = vld [vmem:[%s2 + $0x10] sm:$0xff]
        %v255 = vld [vmem:[%s2 + $0x18] sm:$0xff]
        %v256 = vld [vmem:[%s2 + $0x20] sm:$0xff]
        %v257 = vld [vmem:[%s2 + $0x28] sm:$0xff]
        %v258 = vld [vmem:[%s2 + $0x30] sm:$0xff]
        %v259 = vld [vmem:[%s2 + $0x38] sm:$0xff]
        %v260 = vld [vmem:[%s2 + $0x40] sm:$0xff]
        %v261 = vld [vmem:[%s2 + $0x48] sm:$0xff]
        %v262 = vld [vmem:[%s2 + $0x50] sm:$0xff]
        %v263 = vld [vmem:[%s2 + $0x58] sm:$0xff]
        %v264 = vld [vmem:[%s2 + $0x60] sm:$0xff]
        %v265 = vld [vmem:[%s2 + $0x68] sm:$0xff]
        %v266 = vld [vmem:[%s2 + $0x70] sm:$0xff]
        %v267 = vld [vmem:[%s2 + $0x78] sm:$0xff]
        %v268 = vld [vmem:[%s2 + $0x80] sm:$0xff]
        %v269 = vld [vmem:[%s2 + $0x88] sm:$0xff]
        %v270 = vld [vmem:[%s2 + $0x90] sm:$0xff]
        %v271 = vld [vmem:[%s2 + $0x98] sm:$0xff]
        %v272 = vld [vmem:[%s2 + $0xa0] sm:$0xff]
        %v273 = vld [vmem:[%s2 + $0xa8] sm:$0xff]
        %v274 = vld [vmem:[%s2 + $0xb0] sm:$0xff]
        %v275 = vld [vmem:[%s2 + $0xb8] sm:$0xff]
        %v276 = vld [vmem:[%s2 + $0xc0] sm:$0xff]
        %v277 = vld [vmem:[%s2 + $0xc8] sm:$0xff]
        %v278 = vld [vmem:[%s2 + $0xd0] sm:$0xff]
        %v279 = vld [vmem:[%s2 + $0xd8] sm:$0xff]
        %v280 = vld [vmem:[%s2 + $0xe0] sm:$0xff]
        %v281 = vld [vmem:[%s2 + $0xe8] sm:$0xff]
        %v282 = vld [vmem:[%s2 + $0xf0] sm:$0xff]
        %v283 = vld [vmem:[%s2 + $0xf8] sm:$0xff]
        %284 = vmatprep.subr.mxu0 0.0
        %v285 = vand.u32 %v252, 4294901760
        %286 = vmatpush1.msra.mxu0 %v285
        %287 = vmatprep.subr.mxu0 0.0
        %v288 = vand.u32 %v253, 4294901760
        %289 = vmatpush1.msra.mxu0 %v288
        %290 = vmatprep.subr.mxu0 0.0
        %v291 = vand.u32 %v254, 4294901760
        %292 = vmatpush1.msra.mxu0 %v291
        %293 = vmatprep.subr.mxu0 0.0
        %v294 = vand.u32 %v255, 4294901760
        %295 = vmatpush1.msra.mxu0 %v294
        %296 = vmatprep.subr.mxu0 0.0
        %v297 = vand.u32 %v256, 4294901760
        %298 = vmatpush1.msra.mxu0 %v297
        %299 = vmatprep.subr.mxu0 0.0
        %v300 = vand.u32 %v257, 4294901760
        %301 = vmatpush1.msra.mxu0 %v300
        %302 = vmatprep.subr.mxu0 0.0
        %v303 = vand.u32 %v258, 4294901760
        %304 = vmatpush1.msra.mxu0 %v303
        %305 = vmatprep.subr.mxu0 0.0
        %v306 = vand.u32 %v259, 4294901760
        %307 = vmatpush1.msra.mxu0 %v306
        %308 = vmatprep.subr.mxu0 0.0
        %v309 = vand.u32 %v260, 4294901760
        %310 = vmatpush1.msra.mxu0 %v309
        %311 = vmatprep.subr.mxu0 0.0
        %v312 = vand.u32 %v261, 4294901760
        %313 = vmatpush1.msra.mxu0 %v312
        %314 = vmatprep.subr.mxu0 0.0
        %v315 = vand.u32 %v262, 4294901760
        %316 = vmatpush1.msra.mxu0 %v315
        %317 = vmatprep.subr.mxu0 0.0
        %v318 = vand.u32 %v263, 4294901760
        %319 = vmatpush1.msra.mxu0 %v318
        %320 = vmatprep.subr.mxu0 0.0
        %v321 = vand.u32 %v264, 4294901760
        %322 = vmatpush1.msra.mxu0 %v321
        %323 = vmatprep.subr.mxu0 0.0
        %v324 = vand.u32 %v265, 4294901760
        %325 = vmatpush1.msra.mxu0 %v324
        %326 = vmatprep.subr.mxu0 0.0
        %v327 = vand.u32 %v266, 4294901760
        %328 = vmatpush1.msra.mxu0 %v327
        %329 = vmatprep.subr.mxu0 0.0
        %v330 = vand.u32 %v267, 4294901760
        %331 = vmatpush1.msra.mxu0 %v330
        %332 = vmatprep.subr.mxu0 0.0
        %v333 = vand.u32 %v268, 4294901760
        %334 = vmatpush1.msra.mxu0 %v333
        %335 = vmatprep.subr.mxu0 0.0
        %v336 = vand.u32 %v269, 4294901760
        %337 = vmatpush1.msra.mxu0 %v336
        %338 = vmatprep.subr.mxu0 0.0
        %v339 = vand.u32 %v270, 4294901760
        %340 = vmatpush1.msra.mxu0 %v339
        %341 = vmatprep.subr.mxu0 0.0
        %v342 = vand.u32 %v271, 4294901760
        %343 = vmatpush1.msra.mxu0 %v342
        %344 = vmatprep.subr.mxu0 0.0
        %v345 = vand.u32 %v272, 4294901760
        %346 = vmatpush1.msra.mxu0 %v345
        %347 = vmatprep.subr.mxu0 0.0
        %v348 = vand.u32 %v273, 4294901760
        %349 = vmatpush1.msra.mxu0 %v348
        %350 = vmatprep.subr.mxu0 0.0
        %v351 = vand.u32 %v274, 4294901760
        %352 = vmatpush1.msra.mxu0 %v351
        %353 = vmatprep.subr.mxu0 0.0
        %v354 = vand.u32 %v275, 4294901760
        %355 = vmatpush1.msra.mxu0 %v354
        %356 = vmatprep.subr.mxu0 0.0
        %v357 = vand.u32 %v276, 4294901760
        %358 = vmatpush1.msra.mxu0 %v357
        %359 = vmatprep.subr.mxu0 0.0
        %v360 = vand.u32 %v277, 4294901760
        %361 = vmatpush1.msra.mxu0 %v360
        %362 = vmatprep.subr.mxu0 0.0
        %v363 = vand.u32 %v278, 4294901760
        %364 = vmatpush1.msra.mxu0 %v363
        %365 = vmatprep.subr.mxu0 0.0
        %v366 = vand.u32 %v279, 4294901760
        %367 = vmatpush1.msra.mxu0 %v366
        %368 = vmatprep.subr.mxu0 0.0
        %v369 = vand.u32 %v280, 4294901760
        %370 = vmatpush1.msra.mxu0 %v369
        %371 = vmatprep.subr.mxu0 0.0
        %v372 = vand.u32 %v281, 4294901760
        %373 = vmatpush1.msra.mxu0 %v372
        %374 = vmatprep.subr.mxu0 0.0
        %v375 = vand.u32 %v282, 4294901760
        %376 = vmatpush1.msra.mxu0 %v375
        %377 = vmatprep.subr.mxu0 0.0
        %v378 = vand.u32 %v283, 4294901760
        %379 = vmatpush1.msra.mxu0 %v378
        %v380 = vand.u32 %v251, 4294901760
        %v381 = vsub.f32 %v251, %v380
        %v382 = vand.u32 %v381, 4294901760
        %v383 = vsub.f32 %v381, %v382
        %v384 = vand.u32 %v383, 4294901760
        %385 = vmatprep.mubr.f32.mxu0 %v384
        %v386 = vand.u32 %v250, 4294901760
        %v387 = vsub.f32 %v250, %v386
        %v388 = vand.u32 %v387, 4294901760
        %v389 = vsub.f32 %v387, %v388
        %v390 = vand.u32 %v389, 4294901760
        %391 = vmatmul.mubr.f32.gmra.mrb[0].mxu0 %v390
        %v392 = vpop.f32.mrb[0].mxu0
        %v393 = vadd.f32 0.0, %v392
        %v394 = vpop.f32.mrb[0].mxu0
        %395 = vdwg.mxu0
        %396 = vmatprep.subr.mxu0 0.0
        %v397 = vand.u32 %v252, 4294901760
        %v398 = vsub.f32 %v252, %v397
        %v399 = vand.u32 %v398, 4294901760
        %v400 = vsub.f32 %v398, %v399
        %v401 = vand.u32 %v400, 4294901760
        %402 = vmatpush1.msra.mxu0 %v401
        %403 = vmatprep.subr.mxu0 0.0
        %v404 = vand.u32 %v253, 4294901760
        %v405 = vsub.f32 %v253, %v404
        %v406 = vand.u32 %v405, 4294901760
        %v407 = vsub.f32 %v405, %v406
        %v408 = vand.u32 %v407, 4294901760
        %409 = vmatpush1.msra.mxu0 %v408
        %410 = vmatprep.subr.mxu0 0.0
        %v411 = vand.u32 %v254, 4294901760
        %v412 = vsub.f32 %v254, %v411
        %v413 = vand.u32 %v412, 4294901760
        %v414 = vsub.f32 %v412, %v413
        %v415 = vand.u32 %v414, 4294901760
        %416 = vmatpush1.msra.mxu0 %v415
        %417 = vmatprep.subr.mxu0 0.0
        %v418 = vand.u32 %v255, 4294901760
        %v419 = vsub.f32 %v255, %v418
        %v420 = vand.u32 %v419, 4294901760
        %v421 = vsub.f32 %v419, %v420
        %v422 = vand.u32 %v421, 4294901760
        %423 = vmatpush1.msra.mxu0 %v422
        %424 = vmatprep.subr.mxu0 0.0
        %v425 = vand.u32 %v256, 4294901760
        %v426 = vsub.f32 %v256, %v425
        %v427 = vand.u32 %v426, 4294901760
        %v428 = vsub.f32 %v426, %v427
        %v429 = vand.u32 %v428, 4294901760
        %430 = vmatpush1.msra.mxu0 %v429
        %431 = vmatprep.subr.mxu0 0.0
        %v432 = vand.u32 %v257, 4294901760
        %v433 = vsub.f32 %v257, %v432
        %v434 = vand.u32 %v433, 4294901760
        %v435 = vsub.f32 %v433, %v434
        %v436 = vand.u32 %v435, 4294901760
        %437 = vmatpush1.msra.mxu0 %v436
        %438 = vmatprep.subr.mxu0 0.0
        %v439 = vand.u32 %v258, 4294901760
        %v440 = vsub.f32 %v258, %v439
        %v441 = vand.u32 %v440, 4294901760
        %v442 = vsub.f32 %v440, %v441
        %v443 = vand.u32 %v442, 4294901760
        %444 = vmatpush1.msra.mxu0 %v443
        %445 = vmatprep.subr.mxu0 0.0
        %v446 = vand.u32 %v259, 4294901760
        %v447 = vsub.f32 %v259, %v446
        %v448 = vand.u32 %v447, 4294901760
        %v449 = vsub.f32 %v447, %v448
        %v450 = vand.u32 %v449, 4294901760
        %451 = vmatpush1.msra.mxu0 %v450
        %452 = vmatprep.subr.mxu0 0.0
        %v453 = vand.u32 %v260, 4294901760
        %v454 = vsub.f32 %v260, %v453
        %v455 = vand.u32 %v454, 4294901760
        %v456 = vsub.f32 %v454, %v455
        %v457 = vand.u32 %v456, 4294901760
        %458 = vmatpush1.msra.mxu0 %v457
        %459 = vmatprep.subr.mxu0 0.0
        %v460 = vand.u32 %v261, 4294901760
        %v461 = vsub.f32 %v261, %v460
        %v462 = vand.u32 %v461, 4294901760
        %v463 = vsub.f32 %v461, %v462
        %v464 = vand.u32 %v463, 4294901760
        %465 = vmatpush1.msra.mxu0 %v464
        %466 = vmatprep.subr.mxu0 0.0
        %v467 = vand.u32 %v262, 4294901760
        %v468 = vsub.f32 %v262, %v467
        %v469 = vand.u32 %v468, 4294901760
        %v470 = vsub.f32 %v468, %v469
        %v471 = vand.u32 %v470, 4294901760
        %472 = vmatpush1.msra.mxu0 %v471
        %473 = vmatprep.subr.mxu0 0.0
        %v474 = vand.u32 %v263, 4294901760
        %v475 = vsub.f32 %v263, %v474
        %v476 = vand.u32 %v475, 4294901760
        %v477 = vsub.f32 %v475, %v476
        %v478 = vand.u32 %v477, 4294901760
        %479 = vmatpush1.msra.mxu0 %v478
        %480 = vmatprep.subr.mxu0 0.0
        %v481 = vand.u32 %v264, 4294901760
        %v482 = vsub.f32 %v264, %v481
        %v483 = vand.u32 %v482, 4294901760
        %v484 = vsub.f32 %v482, %v483
        %v485 = vand.u32 %v484, 4294901760
        %486 = vmatpush1.msra.mxu0 %v485
        %487 = vmatprep.subr.mxu0 0.0
        %v488 = vand.u32 %v265, 4294901760
        %v489 = vsub.f32 %v265, %v488
        %v490 = vand.u32 %v489, 4294901760
        %v491 = vsub.f32 %v489, %v490
        %v492 = vand.u32 %v491, 4294901760
        %493 = vmatpush1.msra.mxu0 %v492
        %494 = vmatprep.subr.mxu0 0.0
        %v495 = vand.u32 %v266, 4294901760
        %v496 = vsub.f32 %v266, %v495
        %v497 = vand.u32 %v496, 4294901760
        %v498 = vsub.f32 %v496, %v497
        %v499 = vand.u32 %v498, 4294901760
        %500 = vmatpush1.msra.mxu0 %v499
        %501 = vmatprep.subr.mxu0 0.0
        %v502 = vand.u32 %v267, 4294901760
        %v503 = vsub.f32 %v267, %v502
        %v504 = vand.u32 %v503, 4294901760
        %v505 = vsub.f32 %v503, %v504
        %v506 = vand.u32 %v505, 4294901760
        %507 = vmatpush1.msra.mxu0 %v506
        %508 = vmatprep.subr.mxu0 0.0
        %v509 = vand.u32 %v268, 4294901760
        %v510 = vsub.f32 %v268, %v509
        %v511 = vand.u32 %v510, 4294901760
        %v512 = vsub.f32 %v510, %v511
        %v513 = vand.u32 %v512, 4294901760
        %514 = vmatpush1.msra.mxu0 %v513
        %515 = vmatprep.subr.mxu0 0.0
        %v516 = vand.u32 %v269, 4294901760
        %v517 = vsub.f32 %v269, %v516
        %v518 = vand.u32 %v517, 4294901760
        %v519 = vsub.f32 %v517, %v518
        %v520 = vand.u32 %v519, 4294901760
        %521 = vmatpush1.msra.mxu0 %v520
        %522 = vmatprep.subr.mxu0 0.0
        %v523 = vand.u32 %v270, 4294901760
        %v524 = vsub.f32 %v270, %v523
        %v525 = vand.u32 %v524, 4294901760
        %v526 = vsub.f32 %v524, %v525
        %v527 = vand.u32 %v526, 4294901760
        %528 = vmatpush1.msra.mxu0 %v527
        %529 = vmatprep.subr.mxu0 0.0
        %v530 = vand.u32 %v271, 4294901760
        %v531 = vsub.f32 %v271, %v530
        %v532 = vand.u32 %v531, 4294901760
        %v533 = vsub.f32 %v531, %v532
        %v534 = vand.u32 %v533, 4294901760
        %535 = vmatpush1.msra.mxu0 %v534
        %536 = vmatprep.subr.mxu0 0.0
        %v537 = vand.u32 %v272, 4294901760
        %v538 = vsub.f32 %v272, %v537
        %v539 = vand.u32 %v538, 4294901760
        %v540 = vsub.f32 %v538, %v539
        %v541 = vand.u32 %v540, 4294901760
        %542 = vmatpush1.msra.mxu0 %v541
        %543 = vmatprep.subr.mxu0 0.0
        %v544 = vand.u32 %v273, 4294901760
        %v545 = vsub.f32 %v273, %v544
        %v546 = vand.u32 %v545, 4294901760
        %v547 = vsub.f32 %v545, %v546
        %v548 = vand.u32 %v547, 4294901760
        %549 = vmatpush1.msra.mxu0 %v548
        %550 = vmatprep.subr.mxu0 0.0
        %v551 = vand.u32 %v274, 4294901760
        %v552 = vsub.f32 %v274, %v551
        %v553 = vand.u32 %v552, 4294901760
        %v554 = vsub.f32 %v552, %v553
        %v555 = vand.u32 %v554, 4294901760
        %556 = vmatpush1.msra.mxu0 %v555
        %557 = vmatprep.subr.mxu0 0.0
        %v558 = vand.u32 %v275, 4294901760
        %v559 = vsub.f32 %v275, %v558
        %v560 = vand.u32 %v559, 4294901760
        %v561 = vsub.f32 %v559, %v560
        %v562 = vand.u32 %v561, 4294901760
        %563 = vmatpush1.msra.mxu0 %v562
        %564 = vmatprep.subr.mxu0 0.0
        %v565 = vand.u32 %v276, 4294901760
        %v566 = vsub.f32 %v276, %v565
        %v567 = vand.u32 %v566, 4294901760
        %v568 = vsub.f32 %v566, %v567
        %v569 = vand.u32 %v568, 4294901760
        %570 = vmatpush1.msra.mxu0 %v569
        %571 = vmatprep.subr.mxu0 0.0
        %v572 = vand.u32 %v277, 4294901760
        %v573 = vsub.f32 %v277, %v572
        %v574 = vand.u32 %v573, 4294901760
        %v575 = vsub.f32 %v573, %v574
        %v576 = vand.u32 %v575, 4294901760
        %577 = vmatpush1.msra.mxu0 %v576
        %578 = vmatprep.subr.mxu0 0.0
        %v579 = vand.u32 %v278, 4294901760
        %v580 = vsub.f32 %v278, %v579
        %v581 = vand.u32 %v580, 4294901760
        %v582 = vsub.f32 %v580, %v581
        %v583 = vand.u32 %v582, 4294901760
        %584 = vmatpush1.msra.mxu0 %v583
        %585 = vmatprep.subr.mxu0 0.0
        %v586 = vand.u32 %v279, 4294901760
        %v587 = vsub.f32 %v279, %v586
        %v588 = vand.u32 %v587, 4294901760
        %v589 = vsub.f32 %v587, %v588
        %v590 = vand.u32 %v589, 4294901760
        %591 = vmatpush1.msra.mxu0 %v590
        %592 = vmatprep.subr.mxu0 0.0
        %v593 = vand.u32 %v280, 4294901760
        %v594 = vsub.f32 %v280, %v593
        %v595 = vand.u32 %v594, 4294901760
        %v596 = vsub.f32 %v594, %v595
        %v597 = vand.u32 %v596, 4294901760
        %598 = vmatpush1.msra.mxu0 %v597
        %599 = vmatprep.subr.mxu0 0.0
        %v600 = vand.u32 %v281, 4294901760
        %v601 = vsub.f32 %v281, %v600
        %v602 = vand.u32 %v601, 4294901760
        %v603 = vsub.f32 %v601, %v602
        %v604 = vand.u32 %v603, 4294901760
        %605 = vmatpush1.msra.mxu0 %v604
        %606 = vmatprep.subr.mxu0 0.0
        %v607 = vand.u32 %v282, 4294901760
        %v608 = vsub.f32 %v282, %v607
        %v609 = vand.u32 %v608, 4294901760
        %v610 = vsub.f32 %v608, %v609
        %v611 = vand.u32 %v610, 4294901760
        %612 = vmatpush1.msra.mxu0 %v611
        %613 = vmatprep.subr.mxu0 0.0
        %v614 = vand.u32 %v283, 4294901760
        %v615 = vsub.f32 %v283, %v614
        %v616 = vand.u32 %v615, 4294901760
        %v617 = vsub.f32 %v615, %v616
        %v618 = vand.u32 %v617, 4294901760
        %619 = vmatpush1.msra.mxu0 %v618
        %v620 = vand.u32 %v251, 4294901760
        %621 = vmatprep.mubr.f32.mxu0 %v620
        %v622 = vand.u32 %v250, 4294901760
        %623 = vmatmul.mubr.f32.gmra.mrb[0].mxu0 %v622
        %v624 = vpop.f32.mrb[0].mxu0
        %v625 = vadd.f32 %v393, %v624
        %v626 = vpop.f32.mrb[0].mxu0
        %627 = vdwg.mxu0
        %628 = vmatprep.subr.mxu0 0.0
        %v629 = vand.u32 %v252, 4294901760
        %v630 = vsub.f32 %v252, %v629
        %631 = vmatpush1.msra.mxu0 %v630
        %632 = vmatprep.subr.mxu0 0.0
        %v633 = vand.u32 %v253, 4294901760
        %v634 = vsub.f32 %v253, %v633
        %635 = vmatpush1.msra.mxu0 %v634
        %636 = vmatprep.subr.mxu0 0.0
        %v637 = vand.u32 %v254, 4294901760
        %v638 = vsub.f32 %v254, %v637
        %639 = vmatpush1.msra.mxu0 %v638
        %640 = vmatprep.subr.mxu0 0.0
        %v641 = vand.u32 %v255, 4294901760
        %v642 = vsub.f32 %v255, %v641
        %643 = vmatpush1.msra.mxu0 %v642
        %644 = vmatprep.subr.mxu0 0.0
        %v645 = vand.u32 %v256, 4294901760
        %v646 = vsub.f32 %v256, %v645
        %647 = vmatpush1.msra.mxu0 %v646
        %648 = vmatprep.subr.mxu0 0.0
        %v649 = vand.u32 %v257, 4294901760
        %v650 = vsub.f32 %v257, %v649
        %651 = vmatpush1.msra.mxu0 %v650
        %652 = vmatprep.subr.mxu0 0.0
        %v653 = vand.u32 %v258, 4294901760
        %v654 = vsub.f32 %v258, %v653
        %655 = vmatpush1.msra.mxu0 %v654
        %656 = vmatprep.subr.mxu0 0.0
        %v657 = vand.u32 %v259, 4294901760
        %v658 = vsub.f32 %v259, %v657
        %659 = vmatpush1.msra.mxu0 %v658
        %660 = vmatprep.subr.mxu0 0.0
        %v661 = vand.u32 %v260, 4294901760
        %v662 = vsub.f32 %v260, %v661
        %663 = vmatpush1.msra.mxu0 %v662
        %664 = vmatprep.subr.mxu0 0.0
        %v665 = vand.u32 %v261, 4294901760
        %v666 = vsub.f32 %v261, %v665
        %667 = vmatpush1.msra.mxu0 %v666
        %668 = vmatprep.subr.mxu0 0.0
        %v669 = vand.u32 %v262, 4294901760
        %v670 = vsub.f32 %v262, %v669
        %671 = vmatpush1.msra.mxu0 %v670
        %672 = vmatprep.subr.mxu0 0.0
        %v673 = vand.u32 %v263, 4294901760
        %v674 = vsub.f32 %v263, %v673
        %675 = vmatpush1.msra.mxu0 %v674
        %676 = vmatprep.subr.mxu0 0.0
        %v677 = vand.u32 %v264, 4294901760
        %v678 = vsub.f32 %v264, %v677
        %679 = vmatpush1.msra.mxu0 %v678
        %680 = vmatprep.subr.mxu0 0.0
        %v681 = vand.u32 %v265, 4294901760
        %v682 = vsub.f32 %v265, %v681
        %683 = vmatpush1.msra.mxu0 %v682
        %684 = vmatprep.subr.mxu0 0.0
        %v685 = vand.u32 %v266, 4294901760
        %v686 = vsub.f32 %v266, %v685
        %687 = vmatpush1.msra.mxu0 %v686
        %688 = vmatprep.subr.mxu0 0.0
        %v689 = vand.u32 %v267, 4294901760
        %v690 = vsub.f32 %v267, %v689
        %691 = vmatpush1.msra.mxu0 %v690
        %692 = vmatprep.subr.mxu0 0.0
        %v693 = vand.u32 %v268, 4294901760
        %v694 = vsub.f32 %v268, %v693
        %695 = vmatpush1.msra.mxu0 %v694
        %696 = vmatprep.subr.mxu0 0.0
        %v697 = vand.u32 %v269, 4294901760
        %v698 = vsub.f32 %v269, %v697
        %699 = vmatpush1.msra.mxu0 %v698
        %700 = vmatprep.subr.mxu0 0.0
        %v701 = vand.u32 %v270, 4294901760
        %v702 = vsub.f32 %v270, %v701
        %703 = vmatpush1.msra.mxu0 %v702
        %704 = vmatprep.subr.mxu0 0.0
        %v705 = vand.u32 %v271, 4294901760
        %v706 = vsub.f32 %v271, %v705
        %707 = vmatpush1.msra.mxu0 %v706
        %708 = vmatprep.subr.mxu0 0.0
        %v709 = vand.u32 %v272, 4294901760
        %v710 = vsub.f32 %v272, %v709
        %711 = vmatpush1.msra.mxu0 %v710
        %712 = vmatprep.subr.mxu0 0.0
        %v713 = vand.u32 %v273, 4294901760
        %v714 = vsub.f32 %v273, %v713
        %715 = vmatpush1.msra.mxu0 %v714
        %716 = vmatprep.subr.mxu0 0.0
        %v717 = vand.u32 %v274, 4294901760
        %v718 = vsub.f32 %v274, %v717
        %719 = vmatpush1.msra.mxu0 %v718
        %720 = vmatprep.subr.mxu0 0.0
        %v721 = vand.u32 %v275, 4294901760
        %v722 = vsub.f32 %v275, %v721
        %723 = vmatpush1.msra.mxu0 %v722
        %724 = vmatprep.subr.mxu0 0.0
        %v725 = vand.u32 %v276, 4294901760
        %v726 = vsub.f32 %v276, %v725
        %727 = vmatpush1.msra.mxu0 %v726
        %728 = vmatprep.subr.mxu0 0.0
        %v729 = vand.u32 %v277, 4294901760
        %v730 = vsub.f32 %v277, %v729
        %731 = vmatpush1.msra.mxu0 %v730
        %732 = vmatprep.subr.mxu0 0.0
        %v733 = vand.u32 %v278, 4294901760
        %v734 = vsub.f32 %v278, %v733
        %735 = vmatpush1.msra.mxu0 %v734
        %736 = vmatprep.subr.mxu0 0.0
        %v737 = vand.u32 %v279, 4294901760
        %v738 = vsub.f32 %v279, %v737
        %739 = vmatpush1.msra.mxu0 %v738
        %740 = vmatprep.subr.mxu0 0.0
        %v741 = vand.u32 %v280, 4294901760
        %v742 = vsub.f32 %v280, %v741
        %743 = vmatpush1.msra.mxu0 %v742
        %744 = vmatprep.subr.mxu0 0.0
        %v745 = vand.u32 %v281, 4294901760
        %v746 = vsub.f32 %v281, %v745
        %747 = vmatpush1.msra.mxu0 %v746
        %748 = vmatprep.subr.mxu0 0.0
        %v749 = vand.u32 %v282, 4294901760
        %v750 = vsub.f32 %v282, %v749
        %751 = vmatpush1.msra.mxu0 %v750
        %752 = vmatprep.subr.mxu0 0.0
        %v753 = vand.u32 %v283, 4294901760
        %v754 = vsub.f32 %v283, %v753
        %755 = vmatpush1.msra.mxu0 %v754
        %v756 = vand.u32 %v251, 4294901760
        %v757 = vsub.f32 %v251, %v756
        %758 = vmatprep.mubr.f32.mxu0 %v757
        %v759 = vand.u32 %v250, 4294901760
        %v760 = vsub.f32 %v250, %v759
        %761 = vmatmul.mubr.f32.gmra.mrb[0].mxu0 %v760
        %v762 = vpop.f32.mrb[0].mxu0
        %v763 = vadd.f32 %v625, %v762
        %v764 = vpop.f32.mrb[0].mxu0
        %765 = vdwg.mxu0
        %766 = vmatprep.subr.mxu0 0.0
        %v767 = vand.u32 %v252, 4294901760
        %768 = vmatpush1.msra.mxu0 %v767
        %769 = vmatprep.subr.mxu0 0.0
        %v770 = vand.u32 %v253, 4294901760
        %771 = vmatpush1.msra.mxu0 %v770
        %772 = vmatprep.subr.mxu0 0.0
        %v773 = vand.u32 %v254, 4294901760
        %774 = vmatpush1.msra.mxu0 %v773
        %775 = vmatprep.subr.mxu0 0.0
        %v776 = vand.u32 %v255, 4294901760
        %777 = vmatpush1.msra.mxu0 %v776
        %778 = vmatprep.subr.mxu0 0.0
        %v779 = vand.u32 %v256, 4294901760
        %780 = vmatpush1.msra.mxu0 %v779
        %781 = vmatprep.subr.mxu0 0.0
        %v782 = vand.u32 %v257, 4294901760
        %783 = vmatpush1.msra.mxu0 %v782
        %784 = vmatprep.subr.mxu0 0.0
        %v785 = vand.u32 %v258, 4294901760
        %786 = vmatpush1.msra.mxu0 %v785
        %787 = vmatprep.subr.mxu0 0.0
        %v788 = vand.u32 %v259, 4294901760
        %789 = vmatpush1.msra.mxu0 %v788
        %790 = vmatprep.subr.mxu0 0.0
        %v791 = vand.u32 %v260, 4294901760
        %792 = vmatpush1.msra.mxu0 %v791
        %793 = vmatprep.subr.mxu0 0.0
        %v794 = vand.u32 %v261, 4294901760
        %795 = vmatpush1.msra.mxu0 %v794
        %796 = vmatprep.subr.mxu0 0.0
        %v797 = vand.u32 %v262, 4294901760
        %798 = vmatpush1.msra.mxu0 %v797
        %799 = vmatprep.subr.mxu0 0.0
        %v800 = vand.u32 %v263, 4294901760
        %801 = vmatpush1.msra.mxu0 %v800
        %802 = vmatprep.subr.mxu0 0.0
        %v803 = vand.u32 %v264, 4294901760
        %804 = vmatpush1.msra.mxu0 %v803
        %805 = vmatprep.subr.mxu0 0.0
        %v806 = vand.u32 %v265, 4294901760
        %807 = vmatpush1.msra.mxu0 %v806
        %808 = vmatprep.subr.mxu0 0.0
        %v809 = vand.u32 %v266, 4294901760
        %810 = vmatpush1.msra.mxu0 %v809
        %811 = vmatprep.subr.mxu0 0.0
        %v812 = vand.u32 %v267, 4294901760
        %813 = vmatpush1.msra.mxu0 %v812
        %814 = vmatprep.subr.mxu0 0.0
        %v815 = vand.u32 %v268, 4294901760
        %816 = vmatpush1.msra.mxu0 %v815
        %817 = vmatprep.subr.mxu0 0.0
        %v818 = vand.u32 %v269, 4294901760
        %819 = vmatpush1.msra.mxu0 %v818
        %820 = vmatprep.subr.mxu0 0.0
        %v821 = vand.u32 %v270, 4294901760
        %822 = vmatpush1.msra.mxu0 %v821
        %823 = vmatprep.subr.mxu0 0.0
        %v824 = vand.u32 %v271, 4294901760
        %825 = vmatpush1.msra.mxu0 %v824
        %826 = vmatprep.subr.mxu0 0.0
        %v827 = vand.u32 %v272, 4294901760
        %828 = vmatpush1.msra.mxu0 %v827
        %829 = vmatprep.subr.mxu0 0.0
        %v830 = vand.u32 %v273, 4294901760
        %831 = vmatpush1.msra.mxu0 %v830
        %832 = vmatprep.subr.mxu0 0.0
        %v833 = vand.u32 %v274, 4294901760
        %834 = vmatpush1.msra.mxu0 %v833
        %835 = vmatprep.subr.mxu0 0.0
        %v836 = vand.u32 %v275, 4294901760
        %837 = vmatpush1.msra.mxu0 %v836
        %838 = vmatprep.subr.mxu0 0.0
        %v839 = vand.u32 %v276, 4294901760
        %840 = vmatpush1.msra.mxu0 %v839
        %841 = vmatprep.subr.mxu0 0.0
        %v842 = vand.u32 %v277, 4294901760
        %843 = vmatpush1.msra.mxu0 %v842
        %844 = vmatprep.subr.mxu0 0.0
        %v845 = vand.u32 %v278, 4294901760
        %846 = vmatpush1.msra.mxu0 %v845
        %847 = vmatprep.subr.mxu0 0.0
        %v848 = vand.u32 %v279, 4294901760
        %849 = vmatpush1.msra.mxu0 %v848
        %850 = vmatprep.subr.mxu0 0.0
        %v851 = vand.u32 %v280, 4294901760
        %852 = vmatpush1.msra.mxu0 %v851
        %853 = vmatprep.subr.mxu0 0.0
        %v854 = vand.u32 %v281, 4294901760
        %855 = vmatpush1.msra.mxu0 %v854
        %856 = vmatprep.subr.mxu0 0.0
        %v857 = vand.u32 %v282, 4294901760
        %858 = vmatpush1.msra.mxu0 %v857
        %859 = vmatprep.subr.mxu0 0.0
        %v860 = vand.u32 %v283, 4294901760
        %861 = vmatpush1.msra.mxu0 %v860
        %v862 = vand.u32 %v251, 4294901760
        %v863 = vsub.f32 %v251, %v862
        %v864 = vand.u32 %v863, 4294901760
        %865 = vmatprep.mubr.f32.mxu0 %v864
        %v866 = vand.u32 %v250, 4294901760
        %v867 = vsub.f32 %v250, %v866
        %v868 = vand.u32 %v867, 4294901760
        %869 = vmatmul.mubr.f32.gmra.mrb[0].mxu0 %v868
        %v870 = vpop.f32.mrb[0].mxu0
        %v871 = vadd.f32 %v763, %v870
        %v872 = vpop.f32.mrb[0].mxu0
        %873 = vdwg.mxu0
        %874 = vmatprep.subr.mxu0 0.0
        %v875 = vand.u32 %v252, 4294901760
        %v876 = vsub.f32 %v252, %v875
        %v877 = vand.u32 %v876, 4294901760
        %878 = vmatpush1.msra.mxu0 %v877
        %879 = vmatprep.subr.mxu0 0.0
        %v880 = vand.u32 %v253, 4294901760
        %v881 = vsub.f32 %v253, %v880
        %v882 = vand.u32 %v881, 4294901760
        %883 = vmatpush1.msra.mxu0 %v882
        %884 = vmatprep.subr.mxu0 0.0
        %v885 = vand.u32 %v254, 4294901760
        %v886 = vsub.f32 %v254, %v885
        %v887 = vand.u32 %v886, 4294901760
        %888 = vmatpush1.msra.mxu0 %v887
        %889 = vmatprep.subr.mxu0 0.0
        %v890 = vand.u32 %v255, 4294901760
        %v891 = vsub.f32 %v255, %v890
        %v892 = vand.u32 %v891, 4294901760
        %893 = vmatpush1.msra.mxu0 %v892
        %894 = vmatprep.subr.mxu0 0.0
        %v895 = vand.u32 %v256, 4294901760
        %v896 = vsub.f32 %v256, %v895
        %v897 = vand.u32 %v896, 4294901760
        %898 = vmatpush1.msra.mxu0 %v897
        %899 = vmatprep.subr.mxu0 0.0
        %v900 = vand.u32 %v257, 4294901760
        %v901 = vsub.f32 %v257, %v900
        %v902 = vand.u32 %v901, 4294901760
        %903 = vmatpush1.msra.mxu0 %v902
        %904 = vmatprep.subr.mxu0 0.0
        %v905 = vand.u32 %v258, 4294901760
        %v906 = vsub.f32 %v258, %v905
        %v907 = vand.u32 %v906, 4294901760
        %908 = vmatpush1.msra.mxu0 %v907
        %909 = vmatprep.subr.mxu0 0.0
        %v910 = vand.u32 %v259, 4294901760
        %v911 = vsub.f32 %v259, %v910
        %v912 = vand.u32 %v911, 4294901760
        %913 = vmatpush1.msra.mxu0 %v912
        %914 = vmatprep.subr.mxu0 0.0
        %v915 = vand.u32 %v260, 4294901760
        %v916 = vsub.f32 %v260, %v915
        %v917 = vand.u32 %v916, 4294901760
        %918 = vmatpush1.msra.mxu0 %v917
        %919 = vmatprep.subr.mxu0 0.0
        %v920 = vand.u32 %v261, 4294901760
        %v921 = vsub.f32 %v261, %v920
        %v922 = vand.u32 %v921, 4294901760
        %923 = vmatpush1.msra.mxu0 %v922
        %924 = vmatprep.subr.mxu0 0.0
        %v925 = vand.u32 %v262, 4294901760
        %v926 = vsub.f32 %v262, %v925
        %v927 = vand.u32 %v926, 4294901760
        %928 = vmatpush1.msra.mxu0 %v927
        %929 = vmatprep.subr.mxu0 0.0
        %v930 = vand.u32 %v263, 4294901760
        %v931 = vsub.f32 %v263, %v930
        %v932 = vand.u32 %v931, 4294901760
        %933 = vmatpush1.msra.mxu0 %v932
        %934 = vmatprep.subr.mxu0 0.0
        %v935 = vand.u32 %v264, 4294901760
        %v936 = vsub.f32 %v264, %v935
        %v937 = vand.u32 %v936, 4294901760
        %938 = vmatpush1.msra.mxu0 %v937
        %939 = vmatprep.subr.mxu0 0.0
        %v940 = vand.u32 %v265, 4294901760
        %v941 = vsub.f32 %v265, %v940
        %v942 = vand.u32 %v941, 4294901760
        %943 = vmatpush1.msra.mxu0 %v942
        %944 = vmatprep.subr.mxu0 0.0
        %v945 = vand.u32 %v266, 4294901760
        %v946 = vsub.f32 %v266, %v945
        %v947 = vand.u32 %v946, 4294901760
        %948 = vmatpush1.msra.mxu0 %v947
        %949 = vmatprep.subr.mxu0 0.0
        %v950 = vand.u32 %v267, 4294901760
        %v951 = vsub.f32 %v267, %v950
        %v952 = vand.u32 %v951, 4294901760
        %953 = vmatpush1.msra.mxu0 %v952
        %954 = vmatprep.subr.mxu0 0.0
        %v955 = vand.u32 %v268, 4294901760
        %v956 = vsub.f32 %v268, %v955
        %v957 = vand.u32 %v956, 4294901760
        %958 = vmatpush1.msra.mxu0 %v957
        %959 = vmatprep.subr.mxu0 0.0
        %v960 = vand.u32 %v269, 4294901760
        %v961 = vsub.f32 %v269, %v960
        %v962 = vand.u32 %v961, 4294901760
        %963 = vmatpush1.msra.mxu0 %v962
        %964 = vmatprep.subr.mxu0 0.0
        %v965 = vand.u32 %v270, 4294901760
        %v966 = vsub.f32 %v270, %v965
        %v967 = vand.u32 %v966, 4294901760
        %968 = vmatpush1.msra.mxu0 %v967
        %969 = vmatprep.subr.mxu0 0.0
        %v970 = vand.u32 %v271, 4294901760
        %v971 = vsub.f32 %v271, %v970
        %v972 = vand.u32 %v971, 4294901760
        %973 = vmatpush1.msra.mxu0 %v972
        %974 = vmatprep.subr.mxu0 0.0
        %v975 = vand.u32 %v272, 4294901760
        %v976 = vsub.f32 %v272, %v975
        %v977 = vand.u32 %v976, 4294901760
        %978 = vmatpush1.msra.mxu0 %v977
        %979 = vmatprep.subr.mxu0 0.0
        %v980 = vand.u32 %v273, 4294901760
        %v981 = vsub.f32 %v273, %v980
        %v982 = vand.u32 %v981, 4294901760
        %983 = vmatpush1.msra.mxu0 %v982
        %984 = vmatprep.subr.mxu0 0.0
        %v985 = vand.u32 %v274, 4294901760
        %v986 = vsub.f32 %v274, %v985
        %v987 = vand.u32 %v986, 4294901760
        %988 = vmatpush1.msra.mxu0 %v987
        %989 = vmatprep.subr.mxu0 0.0
        %v990 = vand.u32 %v275, 4294901760
        %v991 = vsub.f32 %v275, %v990
        %v992 = vand.u32 %v991, 4294901760
        %993 = vmatpush1.msra.mxu0 %v992
        %994 = vmatprep.subr.mxu0 0.0
        %v995 = vand.u32 %v276, 4294901760
        %v996 = vsub.f32 %v276, %v995
        %v997 = vand.u32 %v996, 4294901760
        %998 = vmatpush1.msra.mxu0 %v997
        %999 = vmatprep.subr.mxu0 0.0
        %v1000 = vand.u32 %v277, 4294901760
        %v1001 = vsub.f32 %v277, %v1000
        %v1002 = vand.u32 %v1001, 4294901760
        %1003 = vmatpush1.msra.mxu0 %v1002
        %1004 = vmatprep.subr.mxu0 0.0
        %v1005 = vand.u32 %v278, 4294901760
        %v1006 = vsub.f32 %v278, %v1005
        %v1007 = vand.u32 %v1006, 4294901760
        %1008 = vmatpush1.msra.mxu0 %v1007
        %1009 = vmatprep.subr.mxu0 0.0
        %v1010 = vand.u32 %v279, 4294901760
        %v1011 = vsub.f32 %v279, %v1010
        %v1012 = vand.u32 %v1011, 4294901760
        %1013 = vmatpush1.msra.mxu0 %v1012
        %1014 = vmatprep.subr.mxu0 0.0
        %v1015 = vand.u32 %v280, 4294901760
        %v1016 = vsub.f32 %v280, %v1015
        %v1017 = vand.u32 %v1016, 4294901760
        %1018 = vmatpush1.msra.mxu0 %v1017
        %1019 = vmatprep.subr.mxu0 0.0
        %v1020 = vand.u32 %v281, 4294901760
        %v1021 = vsub.f32 %v281, %v1020
        %v1022 = vand.u32 %v1021, 4294901760
        %1023 = vmatpush1.msra.mxu0 %v1022
        %1024 = vmatprep.subr.mxu0 0.0
        %v1025 = vand.u32 %v282, 4294901760
        %v1026 = vsub.f32 %v282, %v1025
        %v1027 = vand.u32 %v1026, 4294901760
        %1028 = vmatpush1.msra.mxu0 %v1027
        %1029 = vmatprep.subr.mxu0 0.0
        %v1030 = vand.u32 %v283, 4294901760
        %v1031 = vsub.f32 %v283, %v1030
        %v1032 = vand.u32 %v1031, 4294901760
        %1033 = vmatpush1.msra.mxu0 %v1032
        %v1034 = vand.u32 %v251, 4294901760
        %1035 = vmatprep.mubr.f32.mxu0 %v1034
        %v1036 = vand.u32 %v250, 4294901760
        %1037 = vmatmul.mubr.f32.gmra.mrb[0].mxu0 %v1036
        %v1038 = vpop.f32.mrb[0].mxu0
        %v1039 = vadd.f32 %v871, %v1038
        %v1040 = vpop.f32.mrb[0].mxu0
        %1041 = vdwg.mxu0
        %1042 = vmatprep.subr.mxu0 0.0
        %v1043 = vand.u32 %v252, 4294901760
        %1044 = vmatpush1.msra.mxu0 %v1043
        %1045 = vmatprep.subr.mxu0 0.0
        %v1046 = vand.u32 %v253, 4294901760
        %1047 = vmatpush1.msra.mxu0 %v1046
        %1048 = vmatprep.subr.mxu0 0.0
        %v1049 = vand.u32 %v254, 4294901760
        %1050 = vmatpush1.msra.mxu0 %v1049
        %1051 = vmatprep.subr.mxu0 0.0
        %v1052 = vand.u32 %v255, 4294901760
        %1053 = vmatpush1.msra.mxu0 %v1052
        %1054 = vmatprep.subr.mxu0 0.0
        %v1055 = vand.u32 %v256, 4294901760
        %1056 = vmatpush1.msra.mxu0 %v1055
        %1057 = vmatprep.subr.mxu0 0.0
        %v1058 = vand.u32 %v257, 4294901760
        %1059 = vmatpush1.msra.mxu0 %v1058
        %1060 = vmatprep.subr.mxu0 0.0
        %v1061 = vand.u32 %v258, 4294901760
        %1062 = vmatpush1.msra.mxu0 %v1061
        %1063 = vmatprep.subr.mxu0 0.0
        %v1064 = vand.u32 %v259, 4294901760
        %1065 = vmatpush1.msra.mxu0 %v1064
        %1066 = vmatprep.subr.mxu0 0.0
        %v1067 = vand.u32 %v260, 4294901760
        %1068 = vmatpush1.msra.mxu0 %v1067
        %1069 = vmatprep.subr.mxu0 0.0
        %v1070 = vand.u32 %v261, 4294901760
        %1071 = vmatpush1.msra.mxu0 %v1070
        %1072 = vmatprep.subr.mxu0 0.0
        %v1073 = vand.u32 %v262, 4294901760
        %1074 = vmatpush1.msra.mxu0 %v1073
        %1075 = vmatprep.subr.mxu0 0.0
        %v1076 = vand.u32 %v263, 4294901760
        %1077 = vmatpush1.msra.mxu0 %v1076
        %1078 = vmatprep.subr.mxu0 0.0
        %v1079 = vand.u32 %v264, 4294901760
        %1080 = vmatpush1.msra.mxu0 %v1079
        %1081 = vmatprep.subr.mxu0 0.0
        %v1082 = vand.u32 %v265, 4294901760
        %1083 = vmatpush1.msra.mxu0 %v1082
        %1084 = vmatprep.subr.mxu0 0.0
        %v1085 = vand.u32 %v266, 4294901760
        %1086 = vmatpush1.msra.mxu0 %v1085
        %1087 = vmatprep.subr.mxu0 0.0
        %v1088 = vand.u32 %v267, 4294901760
        %1089 = vmatpush1.msra.mxu0 %v1088
        %1090 = vmatprep.subr.mxu0 0.0
        %v1091 = vand.u32 %v268, 4294901760
        %1092 = vmatpush1.msra.mxu0 %v1091
        %1093 = vmatprep.subr.mxu0 0.0
        %v1094 = vand.u32 %v269, 4294901760
        %1095 = vmatpush1.msra.mxu0 %v1094
        %1096 = vmatprep.subr.mxu0 0.0
        %v1097 = vand.u32 %v270, 4294901760
        %1098 = vmatpush1.msra.mxu0 %v1097
        %1099 = vmatprep.subr.mxu0 0.0
        %v1100 = vand.u32 %v271, 4294901760
        %1101 = vmatpush1.msra.mxu0 %v1100
        %1102 = vmatprep.subr.mxu0 0.0
        %v1103 = vand.u32 %v272, 4294901760
        %1104 = vmatpush1.msra.mxu0 %v1103
        %1105 = vmatprep.subr.mxu0 0.0
        %v1106 = vand.u32 %v273, 4294901760
        %1107 = vmatpush1.msra.mxu0 %v1106
        %1108 = vmatprep.subr.mxu0 0.0
        %v1109 = vand.u32 %v274, 4294901760
        %1110 = vmatpush1.msra.mxu0 %v1109
        %1111 = vmatprep.subr.mxu0 0.0
        %v1112 = vand.u32 %v275, 4294901760
        %1113 = vmatpush1.msra.mxu0 %v1112
        %1114 = vmatprep.subr.mxu0 0.0
        %v1115 = vand.u32 %v276, 4294901760
        %1116 = vmatpush1.msra.mxu0 %v1115
        %1117 = vmatprep.subr.mxu0 0.0
        %v1118 = vand.u32 %v277, 4294901760
        %1119 = vmatpush1.msra.mxu0 %v1118
        %1120 = vmatprep.subr.mxu0 0.0
        %v1121 = vand.u32 %v278, 4294901760
        %1122 = vmatpush1.msra.mxu0 %v1121
        %1123 = vmatprep.subr.mxu0 0.0
        %v1124 = vand.u32 %v279, 4294901760
        %1125 = vmatpush1.msra.mxu0 %v1124
        %1126 = vmatprep.subr.mxu0 0.0
        %v1127 = vand.u32 %v280, 4294901760
        %1128 = vmatpush1.msra.mxu0 %v1127
        %1129 = vmatprep.subr.mxu0 0.0
        %v1130 = vand.u32 %v281, 4294901760
        %1131 = vmatpush1.msra.mxu0 %v1130
        %1132 = vmatprep.subr.mxu0 0.0
        %v1133 = vand.u32 %v282, 4294901760
        %1134 = vmatpush1.msra.mxu0 %v1133
        %1135 = vmatprep.subr.mxu0 0.0
        %v1136 = vand.u32 %v283, 4294901760
        %1137 = vmatpush1.msra.mxu0 %v1136
        %v1138 = vand.u32 %v251, 4294901760
        %1139 = vmatprep.mubr.f32.mxu0 %v1138
        %v1140 = vand.u32 %v250, 4294901760
        %1141 = vmatmul.mubr.f32.gmra.mrb[0].mxu0 %v1140
        %v1142 = vpop.f32.mrb[0].mxu0
        %v1143 = vadd.f32 %v1039, %v1142
        %v1144 = vpop.f32.mrb[0].mxu0
        %1145 = vdwg.mxu0
        %vm1146 = vcmask 261120
        %1147 = vst.msk [vmem:[%s161] sm:$0xff] %vm1146, %v1143
        %s1148 = sand.u32 %s93, 1
        %s1149 = scalar_lea.sflag [#allocation3], %s1148
        %s1150 = sand.u32 %s93, 1
        %s1151 = smul.addr %s1150, 8
        %s1152 = scalar_lea.vmem [#allocation2], %s1151
        // Predicated region
        $region33: #{sparse_atom_encoder.1} parent=31 // pred_check
          %p1153 = pneg %p103
        $region34: #{sparse_atom_encoder.1} parent=31 // pred_check_branch
          %1155 = sbr.rel (%p1153) target = $region36
        $region35: #{sparse_atom_encoder.1} parent=31 // pred_region
          %s1157 = ssub.s32 128, 128
          %1158 = vsyncadd %s1149, %s1157
          %s1159 = smul.addr %s17, 128
          %s1160 = scalar_lea.hbm %s3, %s1159
          %s1162 = sshll.u32 %s1152, 4
          %s1163 = int_to_ptr.vmem [resolvable:$true] %s1162
          %1165 = dma.vmem_to_hbm [thread:$0]  %s1163, 128, %s1160, %s1149
        $region36: #{sparse_atom_encoder.1} parent=31 // pred_fallthru
          _
      $region32: #{sparse_atom_encoder.1} parent=5 // pred_fallthru
        _
      %p1166 = scmp.le.s32.totalorder 2, %s12
      // Predicated region
      $region37: #{sparse_atom_encoder.1} parent=5 // pred_check
        %p1167 = pneg %p1166
      $region38: #{sparse_atom_encoder.1} parent=5 // pred_check_branch
        %1169 = sbr.rel (%p1167) target = $region40
      $region39: #{sparse_atom_encoder.1} parent=5 // pred_region
        %s1170 = ssub.s32 %s12, 2
        // Predicated region
        $region41: #{sparse_atom_encoder.1} parent=39 // pred_check
          %p1171 = pneg %p109
        $region42: #{sparse_atom_encoder.1} parent=39 // pred_check_branch
          %1173 = sbr.rel (%p1171) target = $region44
        $region43: #{sparse_atom_encoder.1} parent=39 // pred_region
          %s1174 = sand.u32 %s94, 1
          %s1175 = scalar_lea.sflag [#allocation3], %s1174
          %s1176 = sand.u32 %s94, 1
          %s1177 = smul.addr %s1176, 8
          %s1178 = scalar_lea.vmem [#allocation2], %s1177
          %1179 = dma.done %s1175, 128
        $region44: #{sparse_atom_encoder.1} parent=39 // pred_fallthru
          _
      $region40: #{sparse_atom_encoder.1} parent=5 // pred_fallthru
        _
    $region6: #{sparse_atom_encoder.1} parent=1 // loop_footer
      %s16 = sadd.s32 1, %s12
    $region7: #{sparse_atom_encoder.1} parent=1 // loop_footer_branch
      %11 = sbr.rel target = $region3
    $region8: #{sparse_atom_encoder.1} parent=1 // loop_exit
      _
    %1180 = vsyncpa [#allocation3], 1
    %s1181 = scalar_lea.sflag [#allocation3], 1
    %1182 = vsyncpa %s1181, 1

</llo_original>
